<compile_context>
chip_gen: v6e
topology: v6e:2x2x1
jax: 0.10.0
libtpu: 0.0.40
codegen_flags: <defaults>
</compile_context>

<pallas_src>
import functools

import jax
import jax.numpy as jnp
from jax.experimental import pallas as pl
from jax.experimental.pallas import tpu as pltpu

SUBLANE = 8  # f32 sublane granularity: second-to-last block dim must be a multiple


def _round_up(n, m):
    return ((n + m - 1) // m) * m


def _linear_relu_kernel(x_ref, wt_ref, b_ref, o_ref):
    # x_ref:  (tb, IN)   current batch tile
    # wt_ref: (IN, OUT)  resident W^T (tiny, lives in VMEM across all grid steps)
    # b_ref:  (1, OUT)   resident bias (f32)
    # o_ref:  (tb, OUT)
    y = jnp.dot(x_ref[...], wt_ref[...], preferred_element_type=jnp.float32)
    y = y + b_ref[...].astype(jnp.float32)     # broadcast (1, OUT) over rows
    o_ref[...] = jnp.maximum(y, 0.0).astype(o_ref.dtype)


def prepare_params(weight, bias, *, compute_dtype=jnp.float32):
    """One-time param transform (hoisted out of the per-call path).

    weight: (OUT, IN) PyTorch layout, bias: (OUT,) -> W^T (IN, OUT), bias (1, OUT).
    No lane padding: padded HBM slabs cost far more in stream bytes than the
    lane-masked stores they avoid (this kernel is memory-bound, not slot-bound).
    """
    wt = weight.T.astype(compute_dtype)
    b = bias.reshape(1, -1).astype(jnp.float32)
    return wt, b


def _pick_tb(batch, target_tb):
    """Batch tile: multiple of 8, capped by the batch, and (when the batch allows)
    small enough that the grid has >= 2 steps so 'parallel' can use both v7x TCs."""
    b8 = _round_up(batch, SUBLANE)
    tb = min(target_tb, b8)
    if b8 >= 2 * SUBLANE:
        tb = min(tb, _round_up(pl.cdiv(b8, 2), SUBLANE))
    return max(SUBLANE, _round_up(tb, SUBLANE))


@functools.partial(jax.jit, static_argnames=("target_tb",))
def fn_member_forward_pallas(x, wt, b, *, target_tb=2048):
    """x: (B, IN); wt: (IN, OUT) = weight.T; b: (1, OUT) -> (B, OUT)."""
    B, IN = x.shape
    OUT = wt.shape[1]
    out_dtype = x.dtype

    x = x.astype(wt.dtype)  # bf16 streaming path if prepare_params used bf16

    tb = _pick_tb(B, target_tb)
    b_padded = _round_up(B, tb)
    if b_padded != B:
        # Row-only zero pad (just IN columns wide); no lane padding anywhere.
        x = jnp.zeros((b_padded, IN), x.dtype).at[:B, :].set(x)

    grid = (b_padded // tb,)
    in_itemsize = int(jnp.dtype(x.dtype).itemsize)
    out_itemsize = int(jnp.dtype(out_dtype).itemsize)
    cost = pl.CostEstimate(
        flops=2 * B * IN * OUT,
        transcendentals=0,
        bytes_accessed=int(in_itemsize * (b_padded * IN + IN * OUT)
                           + 4 * OUT
                           + out_itemsize * b_padded * OUT),
    )

    out = pl.pallas_call(
        _linear_relu_kernel,
        out_shape=jax.ShapeDtypeStruct((b_padded, OUT), out_dtype),
        grid_spec=pl.GridSpec(
            grid=grid,
            in_specs=[
                pl.BlockSpec((tb, IN), lambda i: (i, 0)),    # x marches over batch
                pl.BlockSpec((IN, OUT), lambda i: (0, 0)),   # W^T resident
                pl.BlockSpec((1, OUT), lambda i: (0, 0)),    # bias resident
            ],
            out_specs=pl.BlockSpec((tb, OUT), lambda i: (i, 0)),
        ),
        compiler_params=pltpu.CompilerParams(
            dimension_semantics=("parallel",),   # shard batch steps across TCs (v7x)
        ),
        cost_estimate=cost,
    )(x, wt, b)

    return out[:B] if b_padded != B else out


def fn_member_forward(x, wt, b, *, target_tb=2048, min_pallas_batch=1024):
    """FnMember.forward. Small-batch fallback: pallas_call fixed cost dwarfs a
    10x10 matmul at tiny B, so let XLA fuse it directly."""
    if x.shape[0] < min_pallas_batch:
        return jnp.maximum(x.astype(wt.dtype) @ wt + b, 0.0).astype(x.dtype)
    return fn_member_forward_pallas(x, wt, b, target_tb=target_tb)


if __name__ == "__main__":
    key = jax.random.PRNGKey(0)
    kx, kw, kb, kx2 = jax.random.split(key, 4)

    B, IN, OUT = 8, 10, 10
    x = jax.random.normal(kx, (B, IN), dtype=jnp.float32)

    # Deterministic params (PyTorch Linear default init: U(-1/sqrt(in), 1/sqrt(in)))
    bound = 1.0 / jnp.sqrt(jnp.float32(IN))
    weight = jax.random.uniform(kw, (OUT, IN), dtype=jnp.float32,
                                minval=-bound, maxval=bound)
    bias = jax.random.uniform(kb, (OUT,), dtype=jnp.float32,
                              minval=-bound, maxval=bound)

    wt, b = prepare_params(weight, bias)

    # 1) Force the Pallas kernel at the small test batch (grid = 1 step).
    out = fn_member_forward_pallas(x, wt, b)
    jax.block_until_ready(out)
    ref = jnp.maximum(x @ weight.T + bias, 0.0)
    assert out.shape == (B, OUT)
    assert jnp.allclose(out, ref, atol=1e-5, rtol=1e-5)

    # 2) Exercise the multi-step pipelined grid (tb=64 -> 4 grid steps, ragged batch).
    B2 = 250
    x2 = jax.random.normal(kx2, (B2, IN), dtype=jnp.float32)
    out2 = fn_member_forward_pallas(x2, wt, b, target_tb=64)
    jax.block_until_ready(out2)
    ref2 = jnp.maximum(x2 @ weight.T + bias, 0.0)
    assert out2.shape == (B2, OUT)
    assert jnp.allclose(out2, ref2, atol=1e-5, rtol=1e-5)

    # 3) Dispatcher fallback path (small batch -> plain jnp), same numerics.
    out3 = fn_member_forward(x, wt, b)
    jax.block_until_ready(out3)
    assert jnp.allclose(out3, ref, atol=1e-5, rtol=1e-5)

    print("KERNEL_OK")
</pallas_src>

<mosaic_0001>
module attributes {stable_mosaic.version = 11 : i64} {
  func.func @_linear_relu_kernel(%arg0: i32, %arg1: memref<8x10xf32, #tpu.memory_space<vmem>>, %arg2: memref<10x10xf32, #tpu.memory_space<vmem>>, %arg3: memref<1x10xf32, #tpu.memory_space<vmem>>, %arg4: memref<8x10xf32, #tpu.memory_space<vmem>>) attributes {dimension_semantics = [#tpu.dimension_semantics<parallel>], iteration_bounds = array<i64: 1>, scalar_prefetch = 0 : i64, scratch_operands = 0 : i64, tpu.core_type = #tpu.core_type<tc>, window_params = [{transform_indices = @transform_0, window_bounds = array<i64: 8, 10>}, {pipeline_mode = #tpu.pipeline_mode<synchronous>, transform_indices = @transform_1, window_bounds = array<i64: 10, 10>}, {pipeline_mode = #tpu.pipeline_mode<synchronous>, transform_indices = @transform_2, window_bounds = array<i64: 1, 10>}, {transform_indices = @transform_3, window_bounds = array<i64: 8, 10>}]} {
    %c0 = arith.constant 0 : index
    %c0_0 = arith.constant 0 : index
    %0 = vector.load %arg1[%c0, %c0_0] : memref<8x10xf32, #tpu.memory_space<vmem>>, vector<8x10xf32>
    %c0_1 = arith.constant 0 : index
    %c0_2 = arith.constant 0 : index
    %1 = vector.load %arg2[%c0_1, %c0_2] : memref<10x10xf32, #tpu.memory_space<vmem>>, vector<10x10xf32>
    %cst = arith.constant dense<0.000000e+00> : vector<8x10xf32>
    %2 = tpu.matmul %0, %1, %cst {dimension_numbers = #tpu.dot_dimension_numbers<[1], [0], [0], [1], [0, 0, 1, 1], [], []>} : vector<8x10xf32>, vector<10x10xf32>, vector<8x10xf32> -> vector<8x10xf32>
    %c0_3 = arith.constant 0 : index
    %c0_4 = arith.constant 0 : index
    %3 = vector.load %arg3[%c0_3, %c0_4] : memref<1x10xf32, #tpu.memory_space<vmem>>, vector<1x10xf32>
    %4 = vector.broadcast %3 : vector<1x10xf32> to vector<8x10xf32>
    %5 = arith.addf %2, %4 : vector<8x10xf32>
    %cst_5 = arith.constant 0.000000e+00 : f32
    %6 = vector.broadcast %cst_5 : f32 to vector<8x10xf32>
    %7 = arith.maximumf %5, %6 : vector<8x10xf32>
    %c0_6 = arith.constant 0 : index
    %c0_7 = arith.constant 0 : index
    %8 = vector.load %arg4[%c0_6, %c0_7] : memref<8x10xf32, #tpu.memory_space<vmem>>, vector<8x10xf32>
    tpu.vector_store %arg4[%c0_6, %c0_7], %7 {strides = array<i32>} : memref<8x10xf32, #tpu.memory_space<vmem>>, vector<8x10xf32>,
    return
  }
  func.func @transform_0(%arg0: i32) -> (i32, i32) {
    %c0_i32 = arith.constant 0 : i32
    %c0_i32_0 = arith.constant 0 : i32
    return %arg0, %c0_i32 : i32, i32
  }
  func.func @transform_1(%arg0: i32) -> (i32, i32) {
    %c0_i32 = arith.constant 0 : i32
    %c0_i32_0 = arith.constant 0 : i32
    %c0_i32_1 = arith.constant 0 : i32
    return %c0_i32, %c0_i32_0 : i32, i32
  }
  func.func @transform_2(%arg0: i32) -> (i32, i32) {
    %c0_i32 = arith.constant 0 : i32
    %c0_i32_0 = arith.constant 0 : i32
    %c0_i32_1 = arith.constant 0 : i32
    return %c0_i32, %c0_i32_0 : i32, i32
  }
  func.func @transform_3(%arg0: i32) -> (i32, i32) {
    %c0_i32 = arith.constant 0 : i32
    %c0_i32_0 = arith.constant 0 : i32
    return %arg0, %c0_i32 : i32, i32
  }
}

</mosaic_0001>

<llo_original>
// kernel: fn_member_forward_pallas.1
$region0: #{fn_member_forward_pallas.1}
  #allocation0 [shape = 'u32[]', space=smem, size = 0x4, offset = 0x4, fixed_abs, tag = 'smem constant byte address 0x4 - core index']
  #allocation1 [shape = 'u32[144,128]{1,0:T(1,128)}', space=vmem, size = 0x12000, scoped, tag = 'internal scratch']
  %s0 = inlined_call_operand.hbm [shape: f32[8,10], index: 0, kind: input, shape index: {}]
  %s1 = inlined_call_operand.hbm [shape: f32[10,10], index: 1, kind: input, shape index: {}]
  %s2 = inlined_call_operand.vmem [shape: f32[1,10], index: 2, kind: input, shape index: {}]
  %s3 = inlined_call_operand.hbm [shape: f32[8,10], index: 3, kind: output, shape index: {}]
  %s4 = sld [smem:[#allocation0]]
  $region30: #{fn_member_forward_pallas.1} parent=0
    _
  %s6 = ssub.s32 1, %s4
  %s7 = scalar_select 0, %s6, %s4
  $region1: #{fn_member_forward_pallas.1} parent=0
    #allocation2 [shape = 'u8[4096]{0}', space=vmem, size = 0x1000, scoped, tag = 'input window, operand 0, single buffered']
    #allocation3 [shape = 's32[1]{0}', space=sflag, size = 0x4, scoped, tag = 'scoped memory for fn_member_forward_pallas.1']
    #allocation4 [shape = 's32[1]{0}', space=sflag, size = 0x4, scoped, tag = 'scoped memory for fn_member_forward_pallas.1']
    #allocation5 [shape = 'u8[8192]{0}', space=vmem, size = 0x2000, scoped, tag = 'input window, operand 1, single buffered']
    #allocation6 [shape = 's32[1]{0}', space=sflag, size = 0x4, scoped, tag = 'scoped memory for fn_member_forward_pallas.1']
    #allocation7 [shape = 'u8[4096]{0}', space=vmem, size = 0x1000, scoped, tag = 'output window, operand 0, single buffered']
    %8 = vsyncpa [#allocation3], 0
    %9 = vsyncpa [#allocation6], 0
    %10 = vsyncpa [#allocation4], 0
    // Predicated region
    $region2: #{fn_member_forward_pallas.1} parent=1 // pred_check
      _
    $region3: #{fn_member_forward_pallas.1} parent=1 // pred_check_branch
      %12 = sbr.rel (0) target = $region5
    $region4: #{fn_member_forward_pallas.1} parent=1 // pred_region
      %s14 = ssub.s32 128, 128
      %15 = vsyncadd [#allocation3], %s14
      %s17 = sshll.u32 [#allocation2], 4
      %s18 = int_to_ptr.vmem [resolvable:$true] %s17
      %20 = dma.hbm_to_vmem [thread:$0]  %s0, 128, %s18, [#allocation3]
    $region5: #{fn_member_forward_pallas.1} parent=1 // pred_fallthru
      _
    // Predicated region
    $region6: #{fn_member_forward_pallas.1} parent=1 // pred_check
      _
    $region7: #{fn_member_forward_pallas.1} parent=1 // pred_check_branch
      %22 = sbr.rel (0) target = $region9
    $region8: #{fn_member_forward_pallas.1} parent=1 // pred_region
      %s24 = ssub.s32 256, 256
      %25 = vsyncadd [#allocation6], %s24
      %s26 = sshll.u32 [#allocation5], 4
      %s27 = int_to_ptr.vmem [resolvable:$true] %s26
      %32 = dma.hbm_to_vmem [thread:$0]  %s1, 256, %s27, [#allocation6], 128, 128, 8
    $region9: #{fn_member_forward_pallas.1} parent=1 // pred_fallthru
      _
    // Predicated region
    $region10: #{fn_member_forward_pallas.1} parent=1 // pred_check
      _
    $region11: #{fn_member_forward_pallas.1} parent=1 // pred_check_branch
      %34 = sbr.rel (0) target = $region13
    $region12: #{fn_member_forward_pallas.1} parent=1 // pred_region
      _
    $region13: #{fn_member_forward_pallas.1} parent=1 // pred_fallthru
      _
    // Predicated region
    $region14: #{fn_member_forward_pallas.1} parent=1 // pred_check
      _
    $region15: #{fn_member_forward_pallas.1} parent=1 // pred_check_branch
      %36 = sbr.rel (0) target = $region17
    $region16: #{fn_member_forward_pallas.1} parent=1 // pred_region
      %37 = dma.done [#allocation3], 128
    $region17: #{fn_member_forward_pallas.1} parent=1 // pred_fallthru
      _
    // Predicated region
    $region18: #{fn_member_forward_pallas.1} parent=1 // pred_check
      _
    $region19: #{fn_member_forward_pallas.1} parent=1 // pred_check_branch
      %39 = sbr.rel (0) target = $region21
    $region20: #{fn_member_forward_pallas.1} parent=1 // pred_region
      %40 = dma.done [#allocation6], 256
    $region21: #{fn_member_forward_pallas.1} parent=1 // pred_fallthru
      _
    %v41 = vld [vmem:[#allocation2] sm:$0xff]
    %v42 = vld [vmem:[#allocation5] sm:$0xff]
    %v43 = vld [vmem:[#allocation5 + $0x8] sm:$0x3]
    %v44 = vld [vmem:[%s2] sm:$0x1]
    %v46 = vlaneseq
    %v47 = vshrl.u32 %v46, 7
    %v48 = vsub.s32 0, %v47
    %v49 = vrot.slane %v44, %v48
    %vm51 = vcmask 80896
    %v53 = vsel %vm51, %v41, 0
    %vm55 = vcmask 1041408
    %v57 = vsel %vm55, %v43, 0
    %59 = vmatprep.subr.mxu0 0.0
    %60 = vmatpush1.msra.mxu0 0.0
    %61 = vmatprep.subr.mxu0 0.0
    %62 = vmatpush1.msra.mxu0 0.0
    %63 = vmatprep.subr.mxu0 0.0
    %64 = vmatpush1.msra.mxu0 0.0
    %65 = vmatprep.subr.mxu0 0.0
    %66 = vmatpush1.msra.mxu0 0.0
    %67 = vmatprep.subr.mxu0 0.0
    %68 = vmatpush1.msra.mxu0 0.0
    %69 = vmatprep.subr.mxu0 0.0
    %70 = vmatpush1.msra.mxu0 0.0
    %71 = vmatprep.subr.mxu0 0.0
    %72 = vmatpush1.msra.mxu0 0.0
    %73 = vmatprep.subr.mxu0 0.0
    %74 = vmatpush1.msra.mxu0 0.0
    %75 = vmatprep.subr.mxu0 0.0
    %76 = vmatpush1.msra.mxu0 0.0
    %77 = vmatprep.subr.mxu0 0.0
    %78 = vmatpush1.msra.mxu0 0.0
    %79 = vmatprep.subr.mxu0 0.0
    %80 = vmatpush1.msra.mxu0 0.0
    %81 = vmatprep.subr.mxu0 0.0
    %82 = vmatpush1.msra.mxu0 0.0
    %83 = vmatprep.subr.mxu0 0.0
    %84 = vmatpush1.msra.mxu0 0.0
    %85 = vmatprep.subr.mxu0 0.0
    %86 = vmatpush1.msra.mxu0 0.0
    %87 = vmatprep.subr.mxu0 0.0
    %88 = vmatpush1.msra.mxu0 %v57
    %89 = vmatprep.subr.mxu0 0.0
    %90 = vmatpush1.msra.mxu0 %v42
    %91 = vmatprep.subr.mxu0 0.0
    %92 = vmatpush2.msra.mxu0 0.0
    %93 = vmatprep.subr.mxu0 0.0
    %94 = vmatpush2.msra.mxu0 0.0
    %95 = vmatprep.subr.mxu0 0.0
    %96 = vmatpush2.msra.mxu0 0.0
    %97 = vmatprep.subr.mxu0 0.0
    %98 = vmatpush2.msra.mxu0 0.0
    %99 = vmatprep.subr.mxu0 0.0
    %100 = vmatpush2.msra.mxu0 0.0
    %101 = vmatprep.subr.mxu0 0.0
    %102 = vmatpush2.msra.mxu0 0.0
    %103 = vmatprep.subr.mxu0 0.0
    %104 = vmatpush2.msra.mxu0 0.0
    %105 = vmatprep.subr.mxu0 0.0
    %106 = vmatpush2.msra.mxu0 0.0
    %107 = vmatprep.subr.mxu0 0.0
    %108 = vmatpush2.msra.mxu0 0.0
    %109 = vmatprep.subr.mxu0 0.0
    %110 = vmatpush2.msra.mxu0 0.0
    %111 = vmatprep.subr.mxu0 0.0
    %112 = vmatpush2.msra.mxu0 0.0
    %113 = vmatprep.subr.mxu0 0.0
    %114 = vmatpush2.msra.mxu0 0.0
    %115 = vmatprep.subr.mxu0 0.0
    %116 = vmatpush2.msra.mxu0 0.0
    %117 = vmatprep.subr.mxu0 0.0
    %118 = vmatpush2.msra.mxu0 0.0
    %119 = vmatprep.subr.mxu0 0.0
    %120 = vmatpush2.msra.mxu0 0.0
    %121 = vmatprep.subr.mxu0 0.0
    %122 = vmatpush2.msra.mxu0 0.0
    %123 = vmatprep.mubr.f32.mxu0 0.0
    %124 = vmatmul.mubr.f32.gmra.mxu0 %v53
    %v125 = vpop.f32.mrf.mxu0
    %v126 = vadd.f32 %v49, %v125
    %v127 = vpop.f32.mrf.mxu0
    %128 = vdwg.mxu0
    %v129 = vmax.f32 %v126, 0.0
    %130 = vst.msk [vmem:[#allocation7] sm:$0xff] %vm51, %v129
    // Predicated region
    $region22: #{fn_member_forward_pallas.1} parent=1 // pred_check
      _
    $region23: #{fn_member_forward_pallas.1} parent=1 // pred_check_branch
      %132 = sbr.rel (0) target = $region25
    $region24: #{fn_member_forward_pallas.1} parent=1 // pred_region
      %s134 = ssub.s32 128, 128
      %135 = vsyncadd [#allocation4], %s134
      %s137 = sshll.u32 [#allocation7], 4
      %s138 = int_to_ptr.vmem [resolvable:$true] %s137
      %140 = dma.vmem_to_hbm [thread:$0]  %s138, 128, %s3, [#allocation4]
    $region25: #{fn_member_forward_pallas.1} parent=1 // pred_fallthru
      _
    // Predicated region
    $region26: #{fn_member_forward_pallas.1} parent=1 // pred_check
      _
    $region27: #{fn_member_forward_pallas.1} parent=1 // pred_check_branch
      %142 = sbr.rel (0) target = $region29
    $region28: #{fn_member_forward_pallas.1} parent=1 // pred_region
      %143 = dma.done [#allocation4], 128
    $region29: #{fn_member_forward_pallas.1} parent=1 // pred_fallthru
      _
    %144 = vsyncpa [#allocation3], 1
    %145 = vsyncpa [#allocation6], 1
    %146 = vsyncpa [#allocation4], 1

</llo_original>
